<compile_context>
chip_gen: v6e
topology: v6e:2x2x1
jax: 0.10.0
libtpu: 0.0.40
codegen_flags: <defaults>
</compile_context>

<pallas_src>
import math
from functools import partial

import jax
import jax.numpy as jnp
from jax.experimental import pallas as pl
from jax.experimental.pallas import tpu as pltpu

_INV_SQRT2 = 0.7071067811865476


def _gelu(x, use_tanh=False):
    if use_tanh:
        # EUP tanh path (frees VALU on v6e/v7x); ~1e-3 deviation from exact GELU.
        c = math.sqrt(2.0 / math.pi)
        return 0.5 * x * (1.0 + jnp.tanh(c * (x + 0.044715 * x * x * x)))
    # matches torch.nn.functional.gelu default (approximate='none')
    return 0.5 * x * (1.0 + jax.lax.erf(x * _INV_SQRT2))


def _make_kernel(Cin_p, C1p, C2, L, Lp, use_tanh_gelu):
    def kernel(x_ref, w1_ref, w2_ref, off_ref, out_ref, stk1_ref, stk2_ref):
        nt = x_ref.shape[1]
        x = x_ref[...].astype(jnp.float32)                    # (Cin_p, Nt)

        # 3-tap stack for conv1: [x_{t-1}; x_t; x_{t+1}] along sublanes.  The
        # roll wrap-around element always lands on a zero pad column (Lp > L),
        # which reproduces Conv1d padding=1's zero boundary exactly.
        stk1_ref[0:Cin_p, :] = pltpu.roll(x, shift=1, axis=1)
        stk1_ref[Cin_p:2 * Cin_p, :] = x
        stk1_ref[2 * Cin_p:3 * Cin_p, :] = pltpu.roll(x, shift=nt - 1, axis=1)

        o1 = off_ref[0:C1p, :]                                # (C1p, 1) f32
        o2 = off_ref[C1p:C1p + C2, :]                         # (C2, 1)  f32

        h1 = jnp.dot(w1_ref[...], stk1_ref[...],
                     preferred_element_type=jnp.float32) + o1

        # In-kernel padding mask: lanes with (pos-in-row >= L) are zeroed so the
        # zero boundary of conv2 holds at position L-1 and across row joins.
        pos = jax.lax.broadcasted_iota(jnp.int32, (1, nt), 1)
        valid = (pos % Lp) < L
        h1 = jnp.where(valid, _gelu(h1, use_tanh_gelu), 0.0)

        stk2_ref[0:C1p, :] = pltpu.roll(h1, shift=1, axis=1)
        stk2_ref[C1p:2 * C1p, :] = h1
        stk2_ref[2 * C1p:3 * C1p, :] = pltpu.roll(h1, shift=nt - 1, axis=1)

        h2 = jnp.dot(w2_ref[...], stk2_ref[...],
                     preferred_element_type=jnp.float32) + o2
        # Padded columns of h2 hold garbage; the wrapper slices them off.
        out_ref[...] = _gelu(h2, use_tanh_gelu).astype(out_ref.dtype)

    return kernel


@partial(jax.jit, static_argnames=("modulation", "io_dtype", "use_tanh_gelu"))
def cnn_reduce_forward(x, params, modulation=12, io_dtype=jnp.bfloat16,
                       use_tanh_gelu=False):
    """x: (B, seq_len) f32 -> (B, L, reduce_ch), L = ceil(seq_len / modulation)."""
    w1s, w2s, offs = params
    B, S = x.shape
    Cin = modulation
    L = math.ceil(S / modulation)
    # TODO(synk): original module hard-asserts L == 1366 (seq_len 16392); relaxed here.

    C1p = w1s.shape[0]
    Cin_p = w1s.shape[1] // 3
    C2 = w2s.shape[0]
    assert w2s.shape[1] == 3 * C1p and Cin_p >= Cin

    Lp = ((L + 1 + 127) // 128) * 128           # 128-aligned, >= 1 zero tail column
    assert Lp >= L + 1                          # roll wrap-around must hit a zero

    # ---- pre-layout: one pad + one transpose, in the narrow io dtype ---------
    xi = x.astype(io_dtype)
    xi = jnp.pad(xi, ((0, 0), (0, Lp * Cin - S)))           # tail -> zero rows l >= L
    xi = xi.reshape(B, Lp, Cin)
    xi = jnp.transpose(xi, (2, 0, 1)).reshape(Cin, B * Lp)  # channels -> sublanes
    x2 = jnp.pad(xi, ((0, Cin_p - Cin), (0, 0)))            # pad channels to Cin_p
    # TODO(synk): if the consumer can take (C2, B, L) directly, both wrapper
    # transposes (one HBM round trip each way) disappear entirely.

    # ---- tile size from a VMEM budget (conservative live-bytes estimate) -----
    bytes_io = jnp.dtype(io_dtype).itemsize
    per_lane = (bytes_io * 2 * (Cin_p + C2)                  # double-buffered I/O
                + 4 * (3 * Cin_p + 3 * C1p)                  # stacked f32 scratch
                + 4 * (3 * Cin_p + 4 * C1p + 2 * C2))        # f32 temporaries
    vmem_budget = 18 << 20                                   # safe on v7x's 64 MiB VMEM
    bt_cap = max(1, vmem_budget // (per_lane * Lp))
    divs = [d for d in range(1, B + 1) if B % d == 0 and d <= bt_cap]
    Bt = max(divs)
    kind = jax.devices()[0].device_kind.lower()
    if ("7" in kind) or ("v5p" in kind):                     # 2 TCs: keep grid even
        even = [d for d in divs if (B // d) % 2 == 0]
        if even:
            Bt = max(even)
    Nt = Bt * Lp
    grid = (B // Bt,)

    kernel = _make_kernel(Cin_p, C1p, C2, L, Lp, use_tanh_gelu)

    def full(a):
        nd = a.ndim
        return pl.BlockSpec(tuple(a.shape), lambda i, _nd=nd: (0,) * _nd)

    out2 = pl.pallas_call(
        kernel,
        out_shape=jax.ShapeDtypeStruct((C2, B * Lp), io_dtype),
        grid_spec=pltpu.PrefetchScalarGridSpec(
            num_scalar_prefetch=0,
            grid=grid,
            in_specs=[
                pl.BlockSpec((Cin_p, Nt), lambda i: (0, i)),
                full(w1s), full(w2s), full(offs),
            ],
            out_specs=pl.BlockSpec((C2, Nt), lambda i: (0, i)),
            scratch_shapes=[pltpu.VMEM((3 * Cin_p, Nt), jnp.float32),
                            pltpu.VMEM((3 * C1p, Nt), jnp.float32)],
        ),
        compiler_params=pltpu.CompilerParams(
            dimension_semantics=("parallel",),
            vmem_limit_bytes=32 * 1024 * 1024),
    )(x2, w1s, w2s, offs)

    out = out2.reshape(C2, B, Lp)[:, :, :L]                  # drop padded lanes
    return jnp.transpose(out, (1, 2, 0)).astype(x.dtype)     # (B, L, C2)


def init_params(key, modulation=12, cnn_dim=32, reduce_ch=8, eps=1e-5):
    # TODO(synk): BatchNorm folded in inference (running-stats) form; matches eval() mode only.
    ks = jax.random.split(key, 12)
    # torch Conv1d weight layout is (out, in, k); tap 0 pairs with x[t-1].
    w1_t = 0.1 * jax.random.normal(ks[0], (cnn_dim, modulation, 3), jnp.float32)
    b1 = 0.1 * jax.random.normal(ks[1], (cnn_dim,), jnp.float32)
    w2_t = 0.1 * jax.random.normal(ks[2], (reduce_ch, cnn_dim, 3), jnp.float32)
    b2 = 0.1 * jax.random.normal(ks[3], (reduce_ch,), jnp.float32)
    g1 = 1.0 + 0.1 * jax.random.normal(ks[4], (cnn_dim,), jnp.float32)
    beta1 = 0.1 * jax.random.normal(ks[5], (cnn_dim,), jnp.float32)
    mu1 = 0.1 * jax.random.normal(ks[6], (cnn_dim,), jnp.float32)
    var1 = jnp.abs(1.0 + 0.1 * jax.random.normal(ks[7], (cnn_dim,), jnp.float32))
    g2 = 1.0 + 0.1 * jax.random.normal(ks[8], (reduce_ch,), jnp.float32)
    beta2 = 0.1 * jax.random.normal(ks[9], (reduce_ch,), jnp.float32)
    mu2 = 0.1 * jax.random.normal(ks[10], (reduce_ch,), jnp.float32)
    var2 = jnp.abs(1.0 + 0.1 * jax.random.normal(ks[11], (reduce_ch,), jnp.float32))

    s1 = g1 / jnp.sqrt(var1 + eps)
    s2 = g2 / jnp.sqrt(var2 + eps)

    # Sublane / bf16-pack aligned padded channel counts (16 for modulation=12).
    cin_p = ((modulation + 15) // 16) * 16
    c1_p = ((cnn_dim + 15) // 16) * 16

    def stack_fold(w_t, s, cin_pad, cout_pad):
        cout, cin, _ = w_t.shape
        wf = w_t * s[:, None, None]                          # fold BN scale
        w = jnp.zeros((cout_pad, 3 * cin_pad), jnp.float32)
        for tap in range(3):                                 # columns: [t-1 | t | t+1]
            w = w.at[:cout, tap * cin_pad:tap * cin_pad + cin].set(wf[:, :, tap])
        return w

    w1s = stack_fold(w1_t, s1, cin_p, c1_p)                  # (C1p, 3*Cin_p)
    w2s = stack_fold(w2_t, s2, c1_p, reduce_ch)              # (C2,  3*C1p)

    o1 = jnp.zeros((c1_p,), jnp.float32).at[:cnn_dim].set((b1 - mu1) * s1 + beta1)
    o2 = (b2 - mu2) * s2 + beta2
    offs = jnp.concatenate([o1, o2]).reshape(-1, 1)          # (C1p + C2, 1)
    return (w1s, w2s, offs)


def reference_forward(x, params, modulation=12):
    # pure-JAX reference (same folded math, no Pallas) for correctness checking
    w1s, w2s, offs = params
    C1p = w1s.shape[0]
    Cin_p = w1s.shape[1] // 3
    B, S = x.shape
    L = math.ceil(S / modulation)
    h = jnp.pad(x, ((0, 0), (0, L * modulation - S))).reshape(B, L, modulation)
    h = jnp.pad(h, ((0, 0), (0, 0), (0, Cin_p - modulation)))
    o1 = offs[:C1p, 0]
    o2 = offs[C1p:, 0]

    def layer(h, ws, o):
        cp = ws.shape[1] // 3
        wm, w0, wp = ws[:, :cp], ws[:, cp:2 * cp], ws[:, 2 * cp:]
        hm1 = jnp.pad(h, ((0, 0), (1, 0), (0, 0)))[:, :-1, :]
        hp1 = jnp.pad(h, ((0, 0), (0, 1), (0, 0)))[:, 1:, :]
        y = (jnp.einsum('blc,oc->blo', hm1, wm)
             + jnp.einsum('blc,oc->blo', h, w0)
             + jnp.einsum('blc,oc->blo', hp1, wp)) + o
        return _gelu(y)

    return layer(layer(h, w1s, o1), w2s, o2)


if __name__ == "__main__":
    key = jax.random.PRNGKey(0)
    kx, kp = jax.random.split(key)

    # small shapes consistent with the module: modulation=12 input channels,
    # CNN_dim=32, reduce_ch=8, seq_len not a multiple of 12 (exercises Padding).
    B, modulation, cnn_dim, reduce_ch = 2, 12, 32, 8
    seq_len = 12 * 64 - 5                                    # L = 64

    x = jax.random.normal(kx, (B, seq_len), jnp.float32)
    params = init_params(kp, modulation, cnn_dim, reduce_ch)
    ref = reference_forward(x, params, modulation)

    # f32 I/O path: must match the pure-JAX reference tightly.
    out32 = jax.block_until_ready(
        cnn_reduce_forward(x, params, modulation=modulation, io_dtype=jnp.float32))
    assert out32.shape == (B, 64, reduce_ch), out32.shape
    err32 = float(jnp.max(jnp.abs(out32 - ref)))
    assert err32 < 2e-4, err32

    # bf16 I/O path (default; halves HBM streams): looser tolerance.
    outbf = jax.block_until_ready(
        cnn_reduce_forward(x, params, modulation=modulation))
    errbf = float(jnp.max(jnp.abs(outbf - ref)))
    assert errbf < 5e-2, errbf

    print("KERNEL_OK")
</pallas_src>

<mosaic_0001>
module attributes {stable_mosaic.version = 11 : i64} {
  func.func @kernel(%arg0: i32, %arg1: memref<16x256xf32, #tpu.memory_space<vmem>>, %arg2: memref<32x48xf32, #tpu.memory_space<vmem>>, %arg3: memref<8x96xf32, #tpu.memory_space<vmem>>, %arg4: memref<40x1xf32, #tpu.memory_space<vmem>>, %arg5: memref<8x256xf32, #tpu.memory_space<vmem>>, %arg6: memref<48x256xf32, #tpu.memory_space<vmem>>, %arg7: memref<96x256xf32, #tpu.memory_space<vmem>>) attributes {dimension_semantics = [#tpu.dimension_semantics<parallel>], iteration_bounds = array<i64: 1>, scalar_prefetch = 0 : i64, scratch_operands = 2 : i64, tpu.core_type = #tpu.core_type<tc>, window_params = [{transform_indices = @transform_0, window_bounds = array<i64: 16, 256>}, {pipeline_mode = #tpu.pipeline_mode<synchronous>, transform_indices = @transform_1, window_bounds = array<i64: 32, 48>}, {pipeline_mode = #tpu.pipeline_mode<synchronous>, transform_indices = @transform_2, window_bounds = array<i64: 8, 96>}, {pipeline_mode = #tpu.pipeline_mode<synchronous>, transform_indices = @transform_3, window_bounds = array<i64: 40, 1>}, {transform_indices = @transform_4, window_bounds = array<i64: 8, 256>}]} {
    %c0 = arith.constant 0 : index
    %c0_0 = arith.constant 0 : index
    %0 = vector.load %arg1[%c0, %c0_0] : memref<16x256xf32, #tpu.memory_space<vmem>>, vector<16x256xf32>
    %c1_i32 = arith.constant 1 : i32
    %1 = tpu.dynamic_rotate %0 by %c1_i32 dim 1 : vector<16x256xf32>, i32 -> vector<16x256xf32>
    %c0_1 = arith.constant 0 : index
    %c0_2 = arith.constant 0 : index
    %2 = vector.load %arg6[%c0_1, %c0_2] : memref<48x256xf32, #tpu.memory_space<vmem>>, vector<16x256xf32>
    tpu.vector_store %arg6[%c0_1, %c0_2], %1 {strides = array<i32>} : memref<48x256xf32, #tpu.memory_space<vmem>>, vector<16x256xf32>,
    %c16 = arith.constant 16 : index
    %c0_3 = arith.constant 0 : index
    %3 = vector.load %arg6[%c16, %c0_3] : memref<48x256xf32, #tpu.memory_space<vmem>>, vector<16x256xf32>
    tpu.vector_store %arg6[%c16, %c0_3], %0 {strides = array<i32>} : memref<48x256xf32, #tpu.memory_space<vmem>>, vector<16x256xf32>,
    %c255_i32 = arith.constant 255 : i32
    %4 = tpu.dynamic_rotate %0 by %c255_i32 dim 1 : vector<16x256xf32>, i32 -> vector<16x256xf32>
    %c32 = arith.constant 32 : index
    %c0_4 = arith.constant 0 : index
    %5 = vector.load %arg6[%c32, %c0_4] : memref<48x256xf32, #tpu.memory_space<vmem>>, vector<16x256xf32>
    tpu.vector_store %arg6[%c32, %c0_4], %4 {strides = array<i32>} : memref<48x256xf32, #tpu.memory_space<vmem>>, vector<16x256xf32>,
    %c0_5 = arith.constant 0 : index
    %c0_6 = arith.constant 0 : index
    %6 = vector.load %arg4[%c0_5, %c0_6] : memref<40x1xf32, #tpu.memory_space<vmem>>, vector<32x1xf32>
    %c32_7 = arith.constant 32 : index
    %c0_8 = arith.constant 0 : index
    %7 = vector.load %arg4[%c32_7, %c0_8] : memref<40x1xf32, #tpu.memory_space<vmem>>, vector<8x1xf32>
    %c0_9 = arith.constant 0 : index
    %c0_10 = arith.constant 0 : index
    %8 = vector.load %arg2[%c0_9, %c0_10] : memref<32x48xf32, #tpu.memory_space<vmem>>, vector<32x48xf32>
    %c0_11 = arith.constant 0 : index
    %c0_12 = arith.constant 0 : index
    %9 = vector.load %arg6[%c0_11, %c0_12] : memref<48x256xf32, #tpu.memory_space<vmem>>, vector<48x256xf32>
    %cst = arith.constant dense<0.000000e+00> : vector<32x256xf32>
    %10 = tpu.matmul %8, %9, %cst {dimension_numbers = #tpu.dot_dimension_numbers<[1], [0], [0], [1], [0, 0, 1, 1], [], []>} : vector<32x48xf32>, vector<48x256xf32>, vector<32x256xf32> -> vector<32x256xf32>
    %11 = vector.broadcast %6 : vector<32x1xf32> to vector<32x256xf32>
    %12 = arith.addf %10, %11 : vector<32x256xf32>
    %13 = tpu.iota {dimensions = array<i32: 1>} : vector<1x256xi32>
    %c128_i32 = arith.constant 128 : i32
    %c0_i32 = arith.constant 0 : i32
    %14 = arith.cmpi eq, %c128_i32, %c0_i32 : i32
    %c1_i32_13 = arith.constant 1 : i32
    %15 = arith.select %14, %c1_i32_13, %c128_i32 : i32
    %16 = vector.broadcast %15 : i32 to vector<1x256xi32>
    %17 = arith.remsi %13, %16 : vector<1x256xi32>
    %c0_i32_14 = arith.constant 0 : i32
    %18 = vector.broadcast %c0_i32_14 : i32 to vector<1x256xi32>
    %19 = arith.cmpi ne, %17, %18 : vector<1x256xi32>
    %c0_i32_15 = arith.constant 0 : i32
    %20 = vector.broadcast %c0_i32_15 : i32 to vector<1x256xi32>
    %21 = arith.cmpi slt, %17, %20 : vector<1x256xi32>
    %c0_i32_16 = arith.constant 0 : i32
    %22 = arith.cmpi slt, %15, %c0_i32_16 : i32
    %23 = vector.broadcast %22 : i1 to vector<1x256xi1>
    %24 = vector.broadcast %23 : vector<1x256xi1> to vector<1x256xi1>
    %25 = arith.xori %21, %24 : vector<1x256xi1>
    %26 = arith.andi %25, %19 : vector<1x256xi1>
    %27 = vector.broadcast %15 : i32 to vector<1x256xi32>
    %28 = arith.addi %17, %27 : vector<1x256xi32>
    %29 = arith.select %26, %28, %17 : vector<1x256xi1>, vector<1x256xi32>
    %c64_i32 = arith.constant 64 : i32
    %30 = vector.broadcast %c64_i32 : i32 to vector<1x256xi32>
    %31 = arith.cmpi slt, %29, %30 : vector<1x256xi32>
    %cst_17 = arith.constant 5.000000e-01 : f32
    %32 = vector.broadcast %cst_17 : f32 to vector<32x256xf32>
    %33 = arith.mulf %32, %12 : vector<32x256xf32>
    %cst_18 = arith.constant 0.707106769 : f32
    %34 = vector.broadcast %cst_18 : f32 to vector<32x256xf32>
    %35 = arith.mulf %12, %34 : vector<32x256xf32>
    %36 = math.erf %35 : vector<32x256xf32>
    %cst_19 = arith.constant 1.000000e+00 : f32
    %37 = vector.broadcast %cst_19 : f32 to vector<32x256xf32>
    %38 = arith.addf %37, %36 : vector<32x256xf32>
    %39 = arith.mulf %33, %38 : vector<32x256xf32>
    %cst_20 = arith.constant 0.000000e+00 : f32
    %40 = vector.shape_cast %31 : vector<1x256xi1> to vector<1x256xi1>
    %41 = vector.broadcast %40 : vector<1x256xi1> to vector<32x256xi1>
    %42 = vector.broadcast %cst_20 : f32 to vector<32x256xf32>
    %43 = arith.select %41, %39, %42 : vector<32x256xi1>, vector<32x256xf32>
    %c1_i32_21 = arith.constant 1 : i32
    %44 = tpu.dynamic_rotate %43 by %c1_i32_21 dim 1 : vector<32x256xf32>, i32 -> vector<32x256xf32>
    %c0_22 = arith.constant 0 : index
    %c0_23 = arith.constant 0 : index
    %45 = vector.load %arg7[%c0_22, %c0_23] : memref<96x256xf32, #tpu.memory_space<vmem>>, vector<32x256xf32>
    tpu.vector_store %arg7[%c0_22, %c0_23], %44 {strides = array<i32>} : memref<96x256xf32, #tpu.memory_space<vmem>>, vector<32x256xf32>,
    %c32_24 = arith.constant 32 : index
    %c0_25 = arith.constant 0 : index
    %46 = vector.load %arg7[%c32_24, %c0_25] : memref<96x256xf32, #tpu.memory_space<vmem>>, vector<32x256xf32>
    tpu.vector_store %arg7[%c32_24, %c0_25], %43 {strides = array<i32>} : memref<96x256xf32, #tpu.memory_space<vmem>>, vector<32x256xf32>,
    %c255_i32_26 = arith.constant 255 : i32
    %47 = tpu.dynamic_rotate %43 by %c255_i32_26 dim 1 : vector<32x256xf32>, i32 -> vector<32x256xf32>
    %c64 = arith.constant 64 : index
    %c0_27 = arith.constant 0 : index
    %48 = vector.load %arg7[%c64, %c0_27] : memref<96x256xf32, #tpu.memory_space<vmem>>, vector<32x256xf32>
    tpu.vector_store %arg7[%c64, %c0_27], %47 {strides = array<i32>} : memref<96x256xf32, #tpu.memory_space<vmem>>, vector<32x256xf32>,
    %c0_28 = arith.constant 0 : index
    %c0_29 = arith.constant 0 : index
    %49 = vector.load %arg3[%c0_28, %c0_29] : memref<8x96xf32, #tpu.memory_space<vmem>>, vector<8x96xf32>
    %c0_30 = arith.constant 0 : index
    %c0_31 = arith.constant 0 : index
    %50 = vector.load %arg7[%c0_30, %c0_31] : memref<96x256xf32, #tpu.memory_space<vmem>>, vector<96x256xf32>
    %cst_32 = arith.constant dense<0.000000e+00> : vector<8x256xf32>
    %51 = tpu.matmul %49, %50, %cst_32 {dimension_numbers = #tpu.dot_dimension_numbers<[1], [0], [0], [1], [0, 0, 1, 1], [], []>} : vector<8x96xf32>, vector<96x256xf32>, vector<8x256xf32> -> vector<8x256xf32>
    %52 = vector.broadcast %7 : vector<8x1xf32> to vector<8x256xf32>
    %53 = arith.addf %51, %52 : vector<8x256xf32>
    %cst_33 = arith.constant 5.000000e-01 : f32
    %54 = vector.broadcast %cst_33 : f32 to vector<8x256xf32>
    %55 = arith.mulf %54, %53 : vector<8x256xf32>
    %cst_34 = arith.constant 0.707106769 : f32
    %56 = vector.broadcast %cst_34 : f32 to vector<8x256xf32>
    %57 = arith.mulf %53, %56 : vector<8x256xf32>
    %58 = math.erf %57 : vector<8x256xf32>
    %cst_35 = arith.constant 1.000000e+00 : f32
    %59 = vector.broadcast %cst_35 : f32 to vector<8x256xf32>
    %60 = arith.addf %59, %58 : vector<8x256xf32>
    %61 = arith.mulf %55, %60 : vector<8x256xf32>
    %c0_36 = arith.constant 0 : index
    %c0_37 = arith.constant 0 : index
    %62 = vector.load %arg5[%c0_36, %c0_37] : memref<8x256xf32, #tpu.memory_space<vmem>>, vector<8x256xf32>
    tpu.vector_store %arg5[%c0_36, %c0_37], %61 {strides = array<i32>} : memref<8x256xf32, #tpu.memory_space<vmem>>, vector<8x256xf32>,
    return
  }
  func.func @transform_0(%arg0: i32) -> (i32, i32) {
    %c0_i32 = arith.constant 0 : i32
    %c0_i32_0 = arith.constant 0 : i32
    return %c0_i32, %arg0 : i32, i32
  }
  func.func @transform_1(%arg0: i32) -> (i32, i32) {
    %c0_i32 = arith.constant 0 : i32
    %c0_i32_0 = arith.constant 0 : i32
    %c0_i32_1 = arith.constant 0 : i32
    return %c0_i32, %c0_i32_0 : i32, i32
  }
  func.func @transform_2(%arg0: i32) -> (i32, i32) {
    %c0_i32 = arith.constant 0 : i32
    %c0_i32_0 = arith.constant 0 : i32
    %c0_i32_1 = arith.constant 0 : i32
    return %c0_i32, %c0_i32_0 : i32, i32
  }
  func.func @transform_3(%arg0: i32) -> (i32, i32) {
    %c0_i32 = arith.constant 0 : i32
    %c0_i32_0 = arith.constant 0 : i32
    %c0_i32_1 = arith.constant 0 : i32
    return %c0_i32, %c0_i32_0 : i32, i32
  }
  func.func @transform_4(%arg0: i32) -> (i32, i32) {
    %c0_i32 = arith.constant 0 : i32
    %c0_i32_0 = arith.constant 0 : i32
    return %c0_i32, %arg0 : i32, i32
  }
}

</mosaic_0001>

<llo_original>
// kernel: cnn_reduce_forward.1
$region0: #{cnn_reduce_forward.1}
  #allocation0 [shape = 'u32[]', space=smem, size = 0x4, offset = 0x4, fixed_abs, tag = 'smem constant byte address 0x4 - core index']
  #allocation1 [shape = 'u32[144,128]{1,0:T(1,128)}', space=vmem, size = 0x12000, scoped, tag = 'internal scratch']
  #allocation2 [shape = 'f32[48,256]{1,0:T(8,128)}', space=vmem, size = 0xc000, scoped, tag = 'scratch operand']
  #allocation3 [shape = 'f32[96,256]{1,0:T(8,128)}', space=vmem, size = 0x18000, scoped, tag = 'scratch operand']
  %s0 = inlined_call_operand.vmem [shape: f32[16,256], index: 0, kind: input, shape index: {}]
  %s1 = inlined_call_operand.vmem [shape: f32[32,48], index: 1, kind: input, shape index: {}]
  %s2 = inlined_call_operand.vmem [shape: f32[8,96], index: 2, kind: input, shape index: {}]
  %s3 = inlined_call_operand.vmem [shape: f32[40,1], index: 3, kind: input, shape index: {}]
  %s4 = inlined_call_operand.vmem [shape: f32[8,256], index: 4, kind: output, shape index: {}]
  %s5 = sld [smem:[#allocation0]]
  $region26: #{cnn_reduce_forward.1} parent=0
    _
  %s7 = ssub.s32 1, %s5
  %s8 = scalar_select 0, %s7, %s5
  // Predicated region
  $region2: #{cnn_reduce_forward.1} parent=0 // pred_check
    _
  $region3: #{cnn_reduce_forward.1} parent=0 // pred_check_branch
    %10 = sbr.rel (0) target = $region5
  $region4: #{cnn_reduce_forward.1} parent=0 // pred_region
    _
  $region5: #{cnn_reduce_forward.1} parent=0 // pred_fallthru
    _
  // Predicated region
  $region6: #{cnn_reduce_forward.1} parent=0 // pred_check
    _
  $region7: #{cnn_reduce_forward.1} parent=0 // pred_check_branch
    %12 = sbr.rel (0) target = $region9
  $region8: #{cnn_reduce_forward.1} parent=0 // pred_region
    _
  $region9: #{cnn_reduce_forward.1} parent=0 // pred_fallthru
    _
  // Predicated region
  $region10: #{cnn_reduce_forward.1} parent=0 // pred_check
    _
  $region11: #{cnn_reduce_forward.1} parent=0 // pred_check_branch
    %14 = sbr.rel (0) target = $region13
  $region12: #{cnn_reduce_forward.1} parent=0 // pred_region
    _
  $region13: #{cnn_reduce_forward.1} parent=0 // pred_fallthru
    _
  // Predicated region
  $region14: #{cnn_reduce_forward.1} parent=0 // pred_check
    _
  $region15: #{cnn_reduce_forward.1} parent=0 // pred_check_branch
    %16 = sbr.rel (0) target = $region17
  $region16: #{cnn_reduce_forward.1} parent=0 // pred_region
    _
  $region17: #{cnn_reduce_forward.1} parent=0 // pred_fallthru
    _
  %v17 = vld [vmem:[%s0] sm:$0xff]
  %v18 = vld [vmem:[%s0 + $0x8] sm:$0xff]
  %v19 = vld [vmem:[%s0 + $0x10] sm:$0xff]
  %v20 = vld [vmem:[%s0 + $0x18] sm:$0xff]
  %21 = vrot.lane.b32.xlu0 %v17, 1
  %v22 = vpop.permute.xlu0 %21
  %23 = vrot.lane.b32.xlu0 %v19, 1
  %v24 = vpop.permute.xlu0 %23
  %25 = vrot.lane.b32.xlu0 %v18, 1
  %v26 = vpop.permute.xlu0 %25
  %27 = vrot.lane.b32.xlu0 %v20, 1
  %v28 = vpop.permute.xlu0 %27
  %v29 = vlaneseq
  %v30 = vand.u32 %v29, 127
  %vm31 = vcmp.lt.s32.totalorder %v30, 1
  %v32 = vsel %vm31, %v22, %v26
  %v33 = vsel %vm31, %v24, %v28
  %v34 = vsel %vm31, %v26, %v22
  %v35 = vsel %vm31, %v28, %v24
  %36 = vst [vmem:[#allocation2] sm:$0xff] %v34
  %37 = vst [vmem:[#allocation2 + $0x8] sm:$0xff] %v32
  %38 = vst [vmem:[#allocation2 + $0x10] sm:$0xff] %v35
  %39 = vst [vmem:[#allocation2 + $0x18] sm:$0xff] %v33
  %40 = vst [vmem:[#allocation2 + $0x20] sm:$0xff] %v17
  %41 = vst [vmem:[#allocation2 + $0x28] sm:$0xff] %v18
  %42 = vst [vmem:[#allocation2 + $0x30] sm:$0xff] %v19
  %43 = vst [vmem:[#allocation2 + $0x38] sm:$0xff] %v20
  %44 = vrot.lane.b32.xlu0 %v17, 127
  %v45 = vpop.permute.xlu0 %44
  %46 = vrot.lane.b32.xlu0 %v19, 127
  %v47 = vpop.permute.xlu0 %46
  %48 = vrot.lane.b32.xlu0 %v18, 127
  %v49 = vpop.permute.xlu0 %48
  %50 = vrot.lane.b32.xlu0 %v20, 127
  %v51 = vpop.permute.xlu0 %50
  %vm52 = vcmp.lt.s32.totalorder %v30, 127
  %v53 = vsel %vm52, %v45, %v49
  %v54 = vsel %vm52, %v47, %v51
  %v55 = vsel %vm52, %v49, %v45
  %v56 = vsel %vm52, %v51, %v47
  %57 = vst [vmem:[#allocation2 + $0x40] sm:$0xff] %v53
  %58 = vst [vmem:[#allocation2 + $0x48] sm:$0xff] %v55
  %59 = vst [vmem:[#allocation2 + $0x50] sm:$0xff] %v54
  %60 = vst [vmem:[#allocation2 + $0x58] sm:$0xff] %v56
  %v61 = vld [vmem:[%s3] sm:$0xff]
  %v62 = vld [vmem:[%s3 + $0x8] sm:$0xff]
  %v63 = vld [vmem:[%s3 + $0x10] sm:$0xff]
  %v64 = vld [vmem:[%s3 + $0x18] sm:$0xff]
  %v65 = vld [vmem:[%s3 + $0x20] sm:$0xff]
  %v66 = vld [vmem:[%s1] sm:$0xff]
  %v67 = vld [vmem:[%s1 + $0x8] sm:$0xff]
  %v68 = vld [vmem:[%s1 + $0x10] sm:$0xff]
  %v69 = vld [vmem:[%s1 + $0x18] sm:$0xff]
  %v70 = vld [vmem:[#allocation2] sm:$0xff]
  %v71 = vld [vmem:[#allocation2 + $0x8] sm:$0xff]
  %v72 = vld [vmem:[#allocation2 + $0x10] sm:$0xff]
  %v73 = vld [vmem:[#allocation2 + $0x18] sm:$0xff]
  %v74 = vld [vmem:[#allocation2 + $0x20] sm:$0xff]
  %v75 = vld [vmem:[#allocation2 + $0x28] sm:$0xff]
  %v76 = vld [vmem:[#allocation2 + $0x30] sm:$0xff]
  %v77 = vld [vmem:[#allocation2 + $0x38] sm:$0xff]
  %v78 = vld [vmem:[#allocation2 + $0x40] sm:$0xff]
  %v79 = vld [vmem:[#allocation2 + $0x48] sm:$0xff]
  %v80 = vld [vmem:[#allocation2 + $0x50] sm:$0xff]
  %v81 = vld [vmem:[#allocation2 + $0x58] sm:$0xff]
  %83 = vset.pattern.permute.xlu0 0
  %84 = vperm.xlu0 %83, %v61
  %v85 = vpop.permute.xlu0 %84
  %88 = vset.pattern.permute.xlu0 0
  %89 = vperm.xlu0 %88, %v62
  %v90 = vpop.permute.xlu0 %89
  %93 = vset.pattern.permute.xlu0 0
  %94 = vperm.xlu0 %93, %v63
  %v95 = vpop.permute.xlu0 %94
  %98 = vset.pattern.permute.xlu0 0
  %99 = vperm.xlu0 %98, %v64
  %v100 = vpop.permute.xlu0 %99
  %vm102 = vcmask 392192
  %v104 = vsel %vm102, %v66, 0
  %v107 = vsel %vm102, %v67, 0
  %v110 = vsel %vm102, %v68, 0
  %v113 = vsel %vm102, %v69, 0
  %115 = vmatprep.subr.mxu0 0.0
  %116 = vmatpush1.msra.mxu0 0.0
  %117 = vmatprep.subr.mxu0 0.0
  %118 = vmatpush1.msra.mxu0 0.0
  %119 = vmatprep.subr.mxu0 0.0
  %120 = vmatpush1.msra.mxu0 0.0
  %121 = vmatprep.subr.mxu0 0.0
  %122 = vmatpush1.msra.mxu0 0.0
  %123 = vmatprep.subr.mxu0 0.0
  %124 = vmatpush1.msra.mxu0 0.0
  %125 = vmatprep.subr.mxu0 0.0
  %126 = vmatpush1.msra.mxu0 0.0
  %127 = vmatprep.subr.mxu0 0.0
  %128 = vmatpush1.msra.mxu0 0.0
  %129 = vmatprep.subr.mxu0 0.0
  %130 = vmatpush1.msra.mxu0 0.0
  %131 = vmatprep.subr.mxu0 0.0
  %132 = vmatpush1.msra.mxu0 0.0
  %133 = vmatprep.subr.mxu0 0.0
  %134 = vmatpush1.msra.mxu0 0.0
  %135 = vmatprep.subr.mxu0 %v81
  %136 = vmatpush1.msra.mxu0 %v80
  %137 = vmatprep.subr.mxu0 %v79
  %138 = vmatpush1.msra.mxu0 %v78
  %139 = vmatprep.subr.mxu0 %v77
  %140 = vmatpush1.msra.mxu0 %v76
  %141 = vmatprep.subr.mxu0 %v75
  %142 = vmatpush1.msra.mxu0 %v74
  %143 = vmatprep.subr.mxu0 %v73
  %144 = vmatpush1.msra.mxu0 %v72
  %145 = vmatprep.subr.mxu0 %v71
  %146 = vmatpush1.msra.mxu0 %v70
  %147 = vmatprep.subr.mxu0 0.0
  %148 = vmatpush2.msra.mxu0 0.0
  %149 = vmatprep.subr.mxu0 0.0
  %150 = vmatpush2.msra.mxu0 0.0
  %151 = vmatprep.subr.mxu0 0.0
  %152 = vmatpush2.msra.mxu0 0.0
  %153 = vmatprep.subr.mxu0 0.0
  %154 = vmatpush2.msra.mxu0 0.0
  %155 = vmatprep.subr.mxu0 0.0
  %156 = vmatpush2.msra.mxu0 0.0
  %157 = vmatprep.subr.mxu0 0.0
  %158 = vmatpush2.msra.mxu0 0.0
  %159 = vmatprep.subr.mxu0 0.0
  %160 = vmatpush2.msra.mxu0 0.0
  %161 = vmatprep.subr.mxu0 0.0
  %162 = vmatpush2.msra.mxu0 0.0
  %163 = vmatprep.subr.mxu0 0.0
  %164 = vmatpush2.msra.mxu0 0.0
  %165 = vmatprep.subr.mxu0 0.0
  %166 = vmatpush2.msra.mxu0 0.0
  %167 = vmatprep.subr.mxu0 0.0
  %168 = vmatpush2.msra.mxu0 0.0
  %169 = vmatprep.subr.mxu0 0.0
  %170 = vmatpush2.msra.mxu0 0.0
  %171 = vmatprep.subr.mxu0 0.0
  %172 = vmatpush2.msra.mxu0 0.0
  %173 = vmatprep.subr.mxu0 0.0
  %174 = vmatpush2.msra.mxu0 0.0
  %175 = vmatprep.subr.mxu0 0.0
  %176 = vmatpush2.msra.mxu0 0.0
  %177 = vmatprep.subr.mxu0 0.0
  %178 = vmatpush2.msra.mxu0 0.0
  %179 = vmatprep.mubr.f32.mxu0 0.0
  %180 = vmatmul.mubr.f32.gmra.mxu0 %v104
  %v181 = vpop.f32.mrf.mxu0
  %v182 = vadd.f32 %v85, %v181
  %v183 = vpop.f32.mrf.mxu0
  %v184 = vadd.f32 %v85, %v183
  %185 = vmatprep.mubr.f32.mxu0 0.0
  %186 = vmatmul.mubr.f32.gmra.mxu0 %v107
  %v187 = vpop.f32.mrf.mxu0
  %v188 = vadd.f32 %v90, %v187
  %v189 = vpop.f32.mrf.mxu0
  %v190 = vadd.f32 %v90, %v189
  %191 = vmatprep.mubr.f32.mxu0 0.0
  %192 = vmatmul.mubr.f32.gmra.mxu0 %v110
  %v193 = vpop.f32.mrf.mxu0
  %v194 = vadd.f32 %v95, %v193
  %v195 = vpop.f32.mrf.mxu0
  %v196 = vadd.f32 %v95, %v195
  %197 = vmatprep.mubr.f32.mxu0 0.0
  %198 = vmatmul.mubr.f32.gmra.mxu0 %v113
  %v199 = vpop.f32.mrf.mxu0
  %v200 = vadd.f32 %v100, %v199
  %v201 = vpop.f32.mrf.mxu0
  %v202 = vadd.f32 %v100, %v201
  %203 = vdwg.mxu0
  %v204 = vadd.s32 %v30, 128
  %vm205 = vcmp.lt.s32.totalorder %v30, 0
  %v206 = vsub.s32 0, %v30
  %v207 = vsel %vm205, %v206, %v30
  %v208 = vshrl.u32 %v207, 7
  %v209 = vand.u32 %v207, 127
  %v210 = vsub.s32 0, %v209
  %v211 = vsel %vm205, %v210, %v209
  %vm212 = vcmp.lt.s32.totalorder %v204, 0
  %v213 = vsub.s32 0, %v204
  %v214 = vsel %vm212, %v213, %v204
  %v215 = vshrl.u32 %v214, 7
  %v216 = vand.u32 %v214, 127
  %v217 = vsub.s32 0, %v216
  %v218 = vsel %vm212, %v217, %v216
  %vm219 = vcmp.ne.s32.totalorder %v211, 0
  %vm220 = vcmp.ne.s32.totalorder %v218, 0
  %vm221 = vcmp.lt.s32.totalorder %v211, 0
  %vm222 = vcmp.lt.s32.totalorder %v218, 0
  %vm223 = vmand %vm221, %vm219
  %vm224 = vmand %vm222, %vm220
  %v225 = vadd.s32 %v211, 128
  %v226 = vadd.s32 %v218, 128
  %v227 = vsel %vm223, %v225, %v211
  %v228 = vsel %vm224, %v226, %v218
  %vm229 = vcmp.lt.s32.totalorder %v227, 64
  %vm230 = vcmp.lt.s32.totalorder %v228, 64
  %v231 = vmul.f32 %v182, 0.5
  %v232 = vmul.f32 %v184, 0.5
  %v233 = vmul.f32 %v188, 0.5
  %v234 = vmul.f32 %v190, 0.5
  %v235 = vmul.f32 %v194, 0.5
  %v236 = vmul.f32 %v196, 0.5
  %v237 = vmul.f32 %v200, 0.5
  %v238 = vmul.f32 %v202, 0.5
  %v239 = vmul.f32 %v182, 0.70710677
  %v240 = vmul.f32 %v184, 0.70710677
  %v241 = vmul.f32 %v188, 0.70710677
  %v242 = vmul.f32 %v190, 0.70710677
  %v243 = vmul.f32 %v194, 0.70710677
  %v244 = vmul.f32 %v196, 0.70710677
  %v245 = vmul.f32 %v200, 0.70710677
  %v246 = vmul.f32 %v202, 0.70710677
  %v247 = verf.f32.pop %v239
  %v248 = verf.f32.pop %v240
  %v249 = verf.f32.pop %v241
  %v250 = verf.f32.pop %v242
  %v251 = verf.f32.pop %v243
  %v252 = verf.f32.pop %v244
  %v253 = verf.f32.pop %v245
  %v254 = verf.f32.pop %v246
  %v255 = vadd.f32 %v247, 1.0
  %v256 = vadd.f32 %v248, 1.0
  %v257 = vadd.f32 %v249, 1.0
  %v258 = vadd.f32 %v250, 1.0
  %v259 = vadd.f32 %v251, 1.0
  %v260 = vadd.f32 %v252, 1.0
  %v261 = vadd.f32 %v253, 1.0
  %v262 = vadd.f32 %v254, 1.0
  %v263 = vmul.f32 %v231, %v255
  %v264 = vmul.f32 %v232, %v256
  %v265 = vmul.f32 %v233, %v257
  %v266 = vmul.f32 %v234, %v258
  %v267 = vmul.f32 %v235, %v259
  %v268 = vmul.f32 %v236, %v260
  %v269 = vmul.f32 %v237, %v261
  %v270 = vmul.f32 %v238, %v262
  %v271 = vsel %vm229, 1, 0
  %v272 = vsel %vm230, 1, 0
  %vm273 = vcmp.eq.s32.totalorder %v271, 1
  %vm274 = vcmp.eq.s32.totalorder %v272, 1
  %v275 = vsel %vm273, %v263, 0.0
  %v276 = vsel %vm274, %v264, 0.0
  %v277 = vsel %vm273, %v265, 0.0
  %v278 = vsel %vm274, %v266, 0.0
  %v279 = vsel %vm273, %v267, 0.0
  %v280 = vsel %vm274, %v268, 0.0
  %v281 = vsel %vm273, %v269, 0.0
  %v282 = vsel %vm274, %v270, 0.0
  %283 = vrot.lane.b32.xlu0 %v275, 1
  %v284 = vpop.permute.xlu0 %283
  %285 = vrot.lane.b32.xlu0 %v277, 1
  %v286 = vpop.permute.xlu0 %285
  %287 = vrot.lane.b32.xlu0 %v279, 1
  %v288 = vpop.permute.xlu0 %287
  %289 = vrot.lane.b32.xlu0 %v281, 1
  %v290 = vpop.permute.xlu0 %289
  %291 = vrot.lane.b32.xlu0 %v276, 1
  %v292 = vpop.permute.xlu0 %291
  %293 = vrot.lane.b32.xlu0 %v278, 1
  %v294 = vpop.permute.xlu0 %293
  %295 = vrot.lane.b32.xlu0 %v280, 1
  %v296 = vpop.permute.xlu0 %295
  %297 = vrot.lane.b32.xlu0 %v282, 1
  %v298 = vpop.permute.xlu0 %297
  %v299 = vsel %vm31, %v284, %v292
  %v300 = vsel %vm31, %v286, %v294
  %v301 = vsel %vm31, %v288, %v296
  %v302 = vsel %vm31, %v290, %v298
  %v303 = vsel %vm31, %v292, %v284
  %v304 = vsel %vm31, %v294, %v286
  %v305 = vsel %vm31, %v296, %v288
  %v306 = vsel %vm31, %v298, %v290
  %307 = vst [vmem:[#allocation3] sm:$0xff] %v303
  %308 = vst [vmem:[#allocation3 + $0x8] sm:$0xff] %v299
  %309 = vst [vmem:[#allocation3 + $0x10] sm:$0xff] %v304
  %310 = vst [vmem:[#allocation3 + $0x18] sm:$0xff] %v300
  %311 = vst [vmem:[#allocation3 + $0x20] sm:$0xff] %v305
  %312 = vst [vmem:[#allocation3 + $0x28] sm:$0xff] %v301
  %313 = vst [vmem:[#allocation3 + $0x30] sm:$0xff] %v306
  %314 = vst [vmem:[#allocation3 + $0x38] sm:$0xff] %v302
  %315 = vst [vmem:[#allocation3 + $0x40] sm:$0xff] %v275
  %316 = vst [vmem:[#allocation3 + $0x48] sm:$0xff] %v276
  %317 = vst [vmem:[#allocation3 + $0x50] sm:$0xff] %v277
  %318 = vst [vmem:[#allocation3 + $0x58] sm:$0xff] %v278
  %319 = vst [vmem:[#allocation3 + $0x60] sm:$0xff] %v279
  %320 = vst [vmem:[#allocation3 + $0x68] sm:$0xff] %v280
  %321 = vst [vmem:[#allocation3 + $0x70] sm:$0xff] %v281
  %322 = vst [vmem:[#allocation3 + $0x78] sm:$0xff] %v282
  %323 = vrot.lane.b32.xlu0 %v275, 127
  %v324 = vpop.permute.xlu0 %323
  %325 = vrot.lane.b32.xlu0 %v277, 127
  %v326 = vpop.permute.xlu0 %325
  %327 = vrot.lane.b32.xlu0 %v279, 127
  %v328 = vpop.permute.xlu0 %327
  %329 = vrot.lane.b32.xlu0 %v281, 127
  %v330 = vpop.permute.xlu0 %329
  %331 = vrot.lane.b32.xlu0 %v276, 127
  %v332 = vpop.permute.xlu0 %331
  %333 = vrot.lane.b32.xlu0 %v278, 127
  %v334 = vpop.permute.xlu0 %333
  %335 = vrot.lane.b32.xlu0 %v280, 127
  %v336 = vpop.permute.xlu0 %335
  %337 = vrot.lane.b32.xlu0 %v282, 127
  %v338 = vpop.permute.xlu0 %337
  %v339 = vsel %vm52, %v324, %v332
  %v340 = vsel %vm52, %v326, %v334
  %v341 = vsel %vm52, %v328, %v336
  %v342 = vsel %vm52, %v330, %v338
  %v343 = vsel %vm52, %v332, %v324
  %v344 = vsel %vm52, %v334, %v326
  %v345 = vsel %vm52, %v336, %v328
  %v346 = vsel %vm52, %v338, %v330
  %347 = vst [vmem:[#allocation3 + $0x80] sm:$0xff] %v339
  %348 = vst [vmem:[#allocation3 + $0x88] sm:$0xff] %v343
  %349 = vst [vmem:[#allocation3 + $0x90] sm:$0xff] %v340
  %350 = vst [vmem:[#allocation3 + $0x98] sm:$0xff] %v344
  %351 = vst [vmem:[#allocation3 + $0xa0] sm:$0xff] %v341
  %352 = vst [vmem:[#allocation3 + $0xa8] sm:$0xff] %v345
  %353 = vst [vmem:[#allocation3 + $0xb0] sm:$0xff] %v342
  %354 = vst [vmem:[#allocation3 + $0xb8] sm:$0xff] %v346
  %v355 = vld [vmem:[%s2] sm:$0xff]
  %v356 = vld [vmem:[#allocation3] sm:$0xff]
  %v357 = vld [vmem:[#allocation3 + $0x8] sm:$0xff]
  %v358 = vld [vmem:[#allocation3 + $0x10] sm:$0xff]
  %v359 = vld [vmem:[#allocation3 + $0x18] sm:$0xff]
  %v360 = vld [vmem:[#allocation3 + $0x20] sm:$0xff]
  %v361 = vld [vmem:[#allocation3 + $0x28] sm:$0xff]
  %v362 = vld [vmem:[#allocation3 + $0x30] sm:$0xff]
  %v363 = vld [vmem:[#allocation3 + $0x38] sm:$0xff]
  %v364 = vld [vmem:[#allocation3 + $0x40] sm:$0xff]
  %v365 = vld [vmem:[#allocation3 + $0x48] sm:$0xff]
  %v366 = vld [vmem:[#allocation3 + $0x50] sm:$0xff]
  %v367 = vld [vmem:[#allocation3 + $0x58] sm:$0xff]
  %v368 = vld [vmem:[#allocation3 + $0x60] sm:$0xff]
  %v369 = vld [vmem:[#allocation3 + $0x68] sm:$0xff]
  %v370 = vld [vmem:[#allocation3 + $0x70] sm:$0xff]
  %v371 = vld [vmem:[#allocation3 + $0x78] sm:$0xff]
  %v372 = vld [vmem:[#allocation3 + $0x80] sm:$0xff]
  %v373 = vld [vmem:[#allocation3 + $0x88] sm:$0xff]
  %v374 = vld [vmem:[#allocation3 + $0x90] sm:$0xff]
  %v375 = vld [vmem:[#allocation3 + $0x98] sm:$0xff]
  %v376 = vld [vmem:[#allocation3 + $0xa0] sm:$0xff]
  %v377 = vld [vmem:[#allocation3 + $0xa8] sm:$0xff]
  %v378 = vld [vmem:[#allocation3 + $0xb0] sm:$0xff]
  %v379 = vld [vmem:[#allocation3 + $0xb8] sm:$0xff]
  %381 = vset.pattern.permute.xlu0 0
  %382 = vperm.xlu0 %381, %v65
  %v383 = vpop.permute.xlu0 %382
  %vm385 = vcmask 785408
  %v387 = vsel %vm385, %v355, 0
  %389 = vmatprep.subr.mxu0 0.0
  %390 = vmatpush1.msra.mxu0 0.0
  %391 = vmatprep.subr.mxu0 0.0
  %392 = vmatpush1.msra.mxu0 0.0
  %393 = vmatprep.subr.mxu0 0.0
  %394 = vmatpush1.msra.mxu0 0.0
  %395 = vmatprep.subr.mxu0 0.0
  %396 = vmatpush1.msra.mxu0 0.0
  %397 = vmatprep.subr.mxu0 %v379
  %398 = vmatpush1.msra.mxu0 %v378
  %399 = vmatprep.subr.mxu0 %v377
  %400 = vmatpush1.msra.mxu0 %v376
  %401 = vmatprep.subr.mxu0 %v375
  %402 = vmatpush1.msra.mxu0 %v374
  %403 = vmatprep.subr.mxu0 %v373
  %404 = vmatpush1.msra.mxu0 %v372
  %405 = vmatprep.subr.mxu0 %v371
  %406 = vmatpush1.msra.mxu0 %v370
  %407 = vmatprep.subr.mxu0 %v369
  %408 = vmatpush1.msra.mxu0 %v368
  %409 = vmatprep.subr.mxu0 %v367
  %410 = vmatpush1.msra.mxu0 %v366
  %411 = vmatprep.subr.mxu0 %v365
  %412 = vmatpush1.msra.mxu0 %v364
  %413 = vmatprep.subr.mxu0 %v363
  %414 = vmatpush1.msra.mxu0 %v362
  %415 = vmatprep.subr.mxu0 %v361
  %416 = vmatpush1.msra.mxu0 %v360
  %417 = vmatprep.subr.mxu0 %v359
  %418 = vmatpush1.msra.mxu0 %v358
  %419 = vmatprep.subr.mxu0 %v357
  %420 = vmatpush1.msra.mxu0 %v356
  %421 = vmatprep.subr.mxu0 0.0
  %422 = vmatpush2.msra.mxu0 0.0
  %423 = vmatprep.subr.mxu0 0.0
  %424 = vmatpush2.msra.mxu0 0.0
  %425 = vmatprep.subr.mxu0 0.0
  %426 = vmatpush2.msra.mxu0 0.0
  %427 = vmatprep.subr.mxu0 0.0
  %428 = vmatpush2.msra.mxu0 0.0
  %429 = vmatprep.subr.mxu0 0.0
  %430 = vmatpush2.msra.mxu0 0.0
  %431 = vmatprep.subr.mxu0 0.0
  %432 = vmatpush2.msra.mxu0 0.0
  %433 = vmatprep.subr.mxu0 0.0
  %434 = vmatpush2.msra.mxu0 0.0
  %435 = vmatprep.subr.mxu0 0.0
  %436 = vmatpush2.msra.mxu0 0.0
  %437 = vmatprep.subr.mxu0 0.0
  %438 = vmatpush2.msra.mxu0 0.0
  %439 = vmatprep.subr.mxu0 0.0
  %440 = vmatpush2.msra.mxu0 0.0
  %441 = vmatprep.subr.mxu0 0.0
  %442 = vmatpush2.msra.mxu0 0.0
  %443 = vmatprep.subr.mxu0 0.0
  %444 = vmatpush2.msra.mxu0 0.0
  %445 = vmatprep.subr.mxu0 0.0
  %446 = vmatpush2.msra.mxu0 0.0
  %447 = vmatprep.subr.mxu0 0.0
  %448 = vmatpush2.msra.mxu0 0.0
  %449 = vmatprep.subr.mxu0 0.0
  %450 = vmatpush2.msra.mxu0 0.0
  %451 = vmatprep.subr.mxu0 0.0
  %452 = vmatpush2.msra.mxu0 0.0
  %453 = vmatprep.mubr.f32.mxu0 0.0
  %454 = vmatmul.mubr.f32.gmra.mxu0 %v387
  %v455 = vpop.f32.mrf.mxu0
  %v456 = vadd.f32 %v383, %v455
  %v457 = vpop.f32.mrf.mxu0
  %v458 = vadd.f32 %v383, %v457
  %459 = vdwg.mxu0
  %v460 = vmul.f32 %v456, 0.5
  %v461 = vmul.f32 %v458, 0.5
  %v462 = vmul.f32 %v456, 0.70710677
  %v463 = vmul.f32 %v458, 0.70710677
  %v464 = verf.f32.pop %v462
  %v465 = verf.f32.pop %v463
  %v466 = vadd.f32 %v464, 1.0
  %v467 = vadd.f32 %v465, 1.0
  %v468 = vmul.f32 %v460, %v466
  %v469 = vmul.f32 %v461, %v467
  %470 = vst [vmem:[%s4] sm:$0xff] %v468
  %471 = vst [vmem:[%s4 + $0x8] sm:$0xff] %v469
  // Predicated region
  $region18: #{cnn_reduce_forward.1} parent=0 // pred_check
    _
  $region19: #{cnn_reduce_forward.1} parent=0 // pred_check_branch
    %473 = sbr.rel (0) target = $region21
  $region20: #{cnn_reduce_forward.1} parent=0 // pred_region
    _
  $region21: #{cnn_reduce_forward.1} parent=0 // pred_fallthru
    _
  // Predicated region
  $region22: #{cnn_reduce_forward.1} parent=0 // pred_check
    _
  $region23: #{cnn_reduce_forward.1} parent=0 // pred_check_branch
    %475 = sbr.rel (0) target = $region25
  $region24: #{cnn_reduce_forward.1} parent=0 // pred_region
    _
  $region25: #{cnn_reduce_forward.1} parent=0 // pred_fallthru
    _

</llo_original>
